<compile_context>
chip_gen: v6e
topology: v6e:2x2x1
jax: 0.10.0
libtpu: 0.0.40
codegen_flags: <defaults>
</compile_context>

<pallas_src>
import functools

import numpy as np
import jax
import jax.numpy as jnp
from jax import lax
from jax.experimental import pallas as pl
from jax.experimental.pallas import tpu as pltpu


# Per-grid-step footprint target: block_elems * (2x-buffered input + 2x-buffered
# output in native dtype + ~8 B of f32 temporaries) <= ~12 MiB.
_VMEM_TARGET_BYTES = 12 * 1024 * 1024
_VMEM_LIMIT_BYTES = 32 * 1024 * 1024
# Tensors at least this big are worth >=2 grid steps on a parallel axis (v7x 2 TCs).
_LARGE_ELEMS = 1 << 18


def _ceil_to(a, b):
    return -(-a // b) * b


def _block_budget_elems(itemsize):
    per_elem = 4 * itemsize + 8
    return max(8 * 128, _VMEM_TARGET_BYTES // per_elem)


def _abs_pow(x, p):
    if p == 2:
        return x * x
    if p == 1:
        return jnp.abs(x)
    return jnp.abs(x) ** p


def _inv_norm(s, p, eps):
    """1 / max(norm, eps) given s = sum(|x|**p) in f32."""
    if p == 2:
        # max(sqrt(s), eps) == sqrt(max(s, eps^2)): one EUP rsqrt, no divide.
        return lax.rsqrt(jnp.maximum(s, eps * eps))
    if p == 1:
        return 1.0 / jnp.maximum(s, eps)
    return 1.0 / jnp.maximum(s ** (1.0 / p), eps)


def _cost(p, size, groups, itemsize):
    trans = groups if p in (1, 2) else 2 * size + 2 * groups
    return pl.CostEstimate(flops=3 * size, transcendentals=int(trans),
                           bytes_accessed=2 * size * itemsize)


# ----------------------------- kernels ------------------------------------ #

def _mid_kernel(x_ref, o_ref, *, p, eps):
    # (tile_m, K, tile_n): reduce over axis 1 (full K on sublanes).
    x = x_ref[...].astype(jnp.float32)
    s = jnp.sum(_abs_pow(x, p), axis=1, keepdims=True)
    o_ref[...] = (x * _inv_norm(s, p, eps)).astype(o_ref.dtype)


def _lastdim_kernel(x_ref, o_ref, *, p, eps):
    # (tile_m, K): reduce over lanes.
    x = x_ref[...].astype(jnp.float32)
    s = jnp.sum(_abs_pow(x, p), axis=-1, keepdims=True)
    o_ref[...] = (x * _inv_norm(s, p, eps)).astype(o_ref.dtype)


def _lastdim_packed_kernel(x_ref, o_ref, *, p, eps, K, L):
    # (tile_r, L): each 128-lane row holds L//K complete reduction groups.
    # Group-sum + broadcast via one MXU matmul against a block-diagonal 0/1
    # matrix -> every load/store is full-lane (no masked vst for K < 128).
    x = x_ref[...].astype(jnp.float32)
    a = _abs_pow(x, p)
    gi = lax.broadcasted_iota(jnp.int32, (L, L), 0) // K
    gj = lax.broadcasted_iota(jnp.int32, (L, L), 1) // K
    seg = (gi == gj).astype(jnp.float32)
    s = jnp.dot(a, seg, preferred_element_type=jnp.float32)
    o_ref[...] = (x * _inv_norm(s, p, eps)).astype(o_ref.dtype)


def _norm_reduce_kernel(x_ref, inv_ref, *, p, eps, K, tile_k):
    # Two-pass path, pass 1: accumulate sum(|x|**p) over the K grid axis into
    # the resident (tile_m, 1, tile_n) f32 output; finalize to 1/max(norm,eps).
    kk = pl.program_id(2)

    @pl.when(kk == 0)
    def _():
        inv_ref[...] = jnp.zeros_like(inv_ref)

    x = x_ref[...].astype(jnp.float32)
    k_idx = kk * tile_k + lax.broadcasted_iota(jnp.int32, x.shape, 1)
    x = jnp.where(k_idx < K, x, 0.0)               # mask the padded K tail
    inv_ref[...] += jnp.sum(_abs_pow(x, p), axis=1, keepdims=True)

    @pl.when(kk == pl.num_programs(2) - 1)
    def _():
        inv_ref[...] = _inv_norm(inv_ref[...], p, eps)


def _scale_kernel(x_ref, inv_ref, o_ref):
    # Two-pass path, pass 2: elementwise rescale.
    o_ref[...] = (x_ref[...].astype(jnp.float32) * inv_ref[...]).astype(o_ref.dtype)


# ----------------------------- dispatch ------------------------------------ #

def _normalize_two_pass_mid(x3, p, eps, M, K, N, itemsize, budget):
    """K too large to keep resident: K-tiled norm pass + scale pass."""
    tile_n = N if N < 128 else int(min((N // 128) * 128, 512))
    tile_m = 1
    pad_n = _ceil_to(tile_n, 128)
    tile_k = int(max(8, min(_ceil_to(K, 8), (budget // pad_n) // 8 * 8)))
    grid = (pl.cdiv(M, tile_m), pl.cdiv(N, tile_n), pl.cdiv(K, tile_k))
    cp3 = pltpu.CompilerParams(
        dimension_semantics=("parallel", "parallel", "arbitrary"),
        vmem_limit_bytes=_VMEM_LIMIT_BYTES)

    inv = pl.pallas_call(
        functools.partial(_norm_reduce_kernel, p=p, eps=eps, K=K, tile_k=tile_k),
        out_shape=jax.ShapeDtypeStruct((M, 1, N), jnp.float32),
        grid=grid,
        in_specs=[pl.BlockSpec((tile_m, tile_k, tile_n), lambda i, j, k: (i, k, j))],
        out_specs=pl.BlockSpec((tile_m, 1, tile_n), lambda i, j, k: (i, 0, j)),
        compiler_params=cp3,
    )(x3)

    return pl.pallas_call(
        _scale_kernel,
        out_shape=jax.ShapeDtypeStruct((M, K, N), x3.dtype),
        grid=grid,
        in_specs=[pl.BlockSpec((tile_m, tile_k, tile_n), lambda i, j, k: (i, k, j)),
                  pl.BlockSpec((tile_m, 1, tile_n), lambda i, j, k: (i, 0, j))],
        out_specs=pl.BlockSpec((tile_m, tile_k, tile_n), lambda i, j, k: (i, k, j)),
        compiler_params=cp3,
    )(x3, inv)


def _normalize_lastdim(x, p, eps, M, K, itemsize, budget, cost, cp1, shape):
    sub = max(8, 32 // itemsize)   # dtype sublane packing: 8 f32 / 16 bf16 / 32 int8

    # Packed path: K < 128 -> 128//K groups per 128-lane row, one MXU matmul
    # for the per-group reduction, fully lane-dense loads/stores.
    if K < 128 and 128 % K == 0 and (M * K) % 128 == 0:
        L = 128
        R = (M * K) // L
        x2 = x.reshape(R, L)
        if R <= 8:
            tile_r = R
        else:
            cand = (budget // L) // 8 * 8
            tile_r = int(max(8, min(cand, (R // 8) * 8)))
            if M * K >= _LARGE_ELEMS and pl.cdiv(R, tile_r) < 2 and R >= 16:
                tile_r = max(8, (pl.cdiv(R, 2) // 8) * 8)
        out2 = pl.pallas_call(
            functools.partial(_lastdim_packed_kernel, p=p, eps=eps, K=K, L=L),
            out_shape=jax.ShapeDtypeStruct((R, L), x.dtype),
            grid=(pl.cdiv(R, tile_r),),
            in_specs=[pl.BlockSpec((tile_r, L), lambda i: (i, 0))],
            out_specs=pl.BlockSpec((tile_r, L), lambda i: (i, 0)),
            compiler_params=cp1,
            cost_estimate=cost,
        )(x2)
        return out2.reshape(shape)

    pad_k = _ceil_to(K, 128)
    if min(M, sub) * pad_k > 2 * budget:
        # TODO(synk): add a K-tiled two-pass Pallas path for dim == last with
        # very large K; use the XLA fallback for this rare configuration.
        xf = x.astype(jnp.float32)
        norm = jnp.sum(jnp.abs(xf) ** p, axis=-1, keepdims=True) ** (1.0 / p)
        return (xf / jnp.maximum(norm, eps)).astype(x.dtype)

    # Plain lane-reduction path ([tile_m, K] blocks).  For 128 <= K the stores
    # are (mostly) full-lane; K < 128 non-packable shapes accept masked stores.
    x2 = x.reshape(M, K)
    if M <= sub:
        tile_m = M
    else:
        cand = (budget // pad_k) // sub * sub
        tile_m = int(max(sub, min(cand, (M // sub) * sub)))
        if M * K >= _LARGE_ELEMS and pl.cdiv(M, tile_m) < 2 and M >= 2 * sub:
            tile_m = max(sub, (pl.cdiv(M, 2) // sub) * sub)
    out2 = pl.pallas_call(
        functools.partial(_lastdim_kernel, p=p, eps=eps),
        out_shape=jax.ShapeDtypeStruct((M, K), x.dtype),
        grid=(pl.cdiv(M, tile_m),),
        in_specs=[pl.BlockSpec((tile_m, K), lambda i: (i, 0))],
        out_specs=pl.BlockSpec((tile_m, K), lambda i: (i, 0)),
        compiler_params=cp1,
        cost_estimate=cost,
    )(x2)
    return out2.reshape(shape)


def normalize_pallas(x, p=2, dim=1, eps=1e-08):
    """Equivalent of torch.nn.functional.normalize(x, p, dim, eps)."""
    ndim = x.ndim
    dim = dim % ndim
    shape = x.shape
    K = int(shape[dim])
    M = int(np.prod(shape[:dim])) if dim > 0 else 1
    N = int(np.prod(shape[dim + 1:])) if dim < ndim - 1 else 1

    itemsize = int(np.dtype(x.dtype).itemsize)
    budget = _block_budget_elems(itemsize)          # in padded-element units
    size = M * K * N
    cost = _cost(p, size, M * N, itemsize)
    cp1 = pltpu.CompilerParams(dimension_semantics=("parallel",),
                               vmem_limit_bytes=_VMEM_LIMIT_BYTES)
    cp2 = pltpu.CompilerParams(dimension_semantics=("parallel", "parallel"),
                               vmem_limit_bytes=_VMEM_LIMIT_BYTES)

    if N == 1:
        return _normalize_lastdim(x, p, eps, M, K, itemsize, budget, cost, cp1, shape)

    # General case (e.g. NCHW with dim=1): view [M, K, N]; K whole on sublanes,
    # N on lanes so the output tiles stay lane-dense.
    x3 = x.reshape(M, K, N)
    pad_k = _ceil_to(K, 8)

    if pad_k * 128 > budget:
        # Even a single 128-lane column of K does not fit: two-pass K-tiled path.
        return _normalize_two_pass_mid(x3, p, eps, M, K, N, itemsize, budget).reshape(shape)

    pad_n_full = _ceil_to(N, 128)
    if pad_k * pad_n_full <= budget:
        tile_n = N                                   # fully contiguous block DMAs
        tile_m = int(min(M, max(1, budget // (pad_k * pad_n_full))))
    else:
        # Here N >= 128; take the largest 128-multiple lane tile that fits.
        tile_n = int(min((N // 128) * 128, max(128, (budget // pad_k) // 128 * 128)))
        tile_m = 1

    # Guarantee >=2 grid steps on large tensors so both v7x TensorCores run.
    if size >= _LARGE_ELEMS and pl.cdiv(M, tile_m) * pl.cdiv(N, tile_n) < 2:
        if M >= 2:
            tile_m = pl.cdiv(M, 2)
        elif N >= 256:
            tile_n = max(128, (pl.cdiv(N, 2) // 128) * 128)

    grid = (pl.cdiv(M, tile_m), pl.cdiv(N, tile_n))
    out3 = pl.pallas_call(
        functools.partial(_mid_kernel, p=p, eps=eps),
        out_shape=jax.ShapeDtypeStruct((M, K, N), x.dtype),
        grid=grid,
        in_specs=[pl.BlockSpec((tile_m, K, tile_n), lambda i, j: (i, 0, j))],
        out_specs=pl.BlockSpec((tile_m, K, tile_n), lambda i, j: (i, 0, j)),
        compiler_params=cp2,
        cost_estimate=cost,
    )(x3)
    return out3.reshape(shape)


class NormalizePallas:
    """Mirror of encoding.nn.customize.Normalize (no parameters)."""

    def __init__(self, p=2, dim=1):
        self.p = p
        self.dim = dim

    def __call__(self, x):
        return normalize_pallas(x, self.p, self.dim, eps=1e-08)


if __name__ == "__main__":
    key = jax.random.PRNGKey(0)
    # NCHW-style input consistent with the module's typical usage.
    x = jax.random.normal(key, (2, 4, 16, 16), dtype=jnp.float32)

    def ref_normalize(x, p, dim, eps=1e-08):
        xf = x.astype(jnp.float32)
        norm = jnp.sum(jnp.abs(xf) ** p, axis=dim, keepdims=True) ** (1.0 / p)
        return (xf / jnp.maximum(norm, eps)).astype(x.dtype)

    ok = True
    for p, dim in [(2, 1), (2, -1), (1, 1), (2, 2), (2, 0), (1, -1)]:
        mod = NormalizePallas(p=p, dim=dim)
        y = jax.block_until_ready(mod(x))
        y_ref = ref_normalize(x, p, dim)
        if y.shape != y_ref.shape or not jnp.allclose(y, y_ref, atol=1e-5, rtol=1e-5):
            ok = False
            print(f"MISMATCH p={p} dim={dim}")

    if ok:
        print("KERNEL_OK")
</pallas_src>

<mosaic_0001>
module attributes {stable_mosaic.version = 11 : i64} {
  func.func @_mid_kernel(%arg0: i32, %arg1: i32, %arg2: memref<2x4x256xf32, #tpu.memory_space<vmem>>, %arg3: memref<2x4x256xf32, #tpu.memory_space<vmem>>) attributes {dimension_semantics = [#tpu.dimension_semantics<parallel>, #tpu.dimension_semantics<parallel>], iteration_bounds = array<i64: 1, 1>, scalar_prefetch = 0 : i64, scratch_operands = 0 : i64, tpu.core_type = #tpu.core_type<tc>, window_params = [{transform_indices = @transform_0, window_bounds = array<i64: 2, 4, 256>}, {transform_indices = @transform_1, window_bounds = array<i64: 2, 4, 256>}]} {
    %c0 = arith.constant 0 : index
    %c0_0 = arith.constant 0 : index
    %c0_1 = arith.constant 0 : index
    %0 = vector.load %arg2[%c0, %c0_0, %c0_1] : memref<2x4x256xf32, #tpu.memory_space<vmem>>, vector<2x4x256xf32>
    %1 = arith.mulf %0, %0 : vector<2x4x256xf32>
    %cst = arith.constant dense<0.000000e+00> : vector<2x256xf32>
    %2 = vector.multi_reduction <add>, %1, %cst [1] : vector<2x4x256xf32> to vector<2x256xf32>
    %3 = vector.shape_cast %2 : vector<2x256xf32> to vector<2x1x256xf32>
    %cst_2 = arith.constant 1.000000e-16 : f32
    %4 = vector.broadcast %cst_2 : f32 to vector<2x1x256xf32>
    %5 = arith.maximumf %3, %4 : vector<2x1x256xf32>
    %6 = math.rsqrt %5 : vector<2x1x256xf32>
    %7 = vector.broadcast %6 : vector<2x1x256xf32> to vector<2x4x256xf32>
    %8 = arith.mulf %0, %7 : vector<2x4x256xf32>
    %c0_3 = arith.constant 0 : index
    %c0_4 = arith.constant 0 : index
    %c0_5 = arith.constant 0 : index
    %9 = vector.load %arg3[%c0_3, %c0_4, %c0_5] : memref<2x4x256xf32, #tpu.memory_space<vmem>>, vector<2x4x256xf32>
    tpu.vector_store %arg3[%c0_3, %c0_4, %c0_5], %8 {strides = array<i32>} : memref<2x4x256xf32, #tpu.memory_space<vmem>>, vector<2x4x256xf32>,
    return
  }
  func.func @transform_0(%arg0: i32, %arg1: i32) -> (i32, i32, i32) {
    %c0_i32 = arith.constant 0 : i32
    %c0_i32_0 = arith.constant 0 : i32
    return %arg0, %c0_i32, %arg1 : i32, i32, i32
  }
  func.func @transform_1(%arg0: i32, %arg1: i32) -> (i32, i32, i32) {
    %c0_i32 = arith.constant 0 : i32
    %c0_i32_0 = arith.constant 0 : i32
    return %arg0, %c0_i32, %arg1 : i32, i32, i32
  }
}

</mosaic_0001>

<llo_original>
// kernel: tpu_custom_call.1
$region0: #{tpu_custom_call.1}
  #allocation0 [shape = 'u32[]', space=smem, size = 0x4, offset = 0x4, fixed_abs, tag = 'smem constant byte address 0x4 - core index']
  #allocation1 [shape = 'u32[144,128]{1,0:T(1,128)}', space=vmem, size = 0x12000, scoped, tag = 'internal scratch']
  %s0 = inlined_call_operand.hbm [shape: f32[2,4,256], index: 0, kind: input, shape index: {}]
  %s1 = inlined_call_operand.hbm [shape: f32[2,4,256], index: 1, kind: output, shape index: {}]
  %s2 = sld [smem:[#allocation0]]
  $region18: #{tpu_custom_call.1} parent=0
    _
  %s4 = ssub.s32 1, %s2
  %s5 = scalar_select 0, %s4, %s2
  $region1: #{tpu_custom_call.1} parent=0
    #allocation2 [shape = 'u8[8192]{0}', space=vmem, size = 0x2000, scoped, tag = 'input window, operand 0, single buffered']
    #allocation3 [shape = 's32[1]{0}', space=sflag, size = 0x4, scoped, tag = 'scoped memory for tpu_custom_call.1']
    #allocation4 [shape = 's32[1]{0}', space=sflag, size = 0x4, scoped, tag = 'scoped memory for tpu_custom_call.1']
    #allocation5 [shape = 'u8[8192]{0}', space=vmem, size = 0x2000, scoped, tag = 'output window, operand 0, single buffered']
    %6 = vsyncpa [#allocation3], 0
    %7 = vsyncpa [#allocation4], 0
    // Predicated region
    $region2: #{tpu_custom_call.1} parent=1 // pred_check
      _
    $region3: #{tpu_custom_call.1} parent=1 // pred_check_branch
      %9 = sbr.rel (0) target = $region5
    $region4: #{tpu_custom_call.1} parent=1 // pred_region
      %s11 = ssub.s32 256, 256
      %12 = vsyncadd [#allocation3], %s11
      %s13 = sshll.u32 [#allocation2], 4
      %s14 = int_to_ptr.vmem [resolvable:$true] %s13
      %19 = dma.hbm_to_vmem [thread:$0]  %s0, 256, %s14, [#allocation3], 128, 128, 8
    $region5: #{tpu_custom_call.1} parent=1 // pred_fallthru
      _
    // Predicated region
    $region6: #{tpu_custom_call.1} parent=1 // pred_check
      _
    $region7: #{tpu_custom_call.1} parent=1 // pred_check_branch
      %21 = sbr.rel (0) target = $region9
    $region8: #{tpu_custom_call.1} parent=1 // pred_region
      %22 = dma.done [#allocation3], 256
    $region9: #{tpu_custom_call.1} parent=1 // pred_fallthru
      _
    %v23 = vld [vmem:[#allocation2] sm:$0xff]
    %v24 = vld [vmem:[#allocation2 + $0x8] sm:$0xff]
    %v25 = vmul.f32 %v23, %v23
    %v26 = vmul.f32 %v24, %v24
    %v29 = vcombine.high %v25, %v25
    %v30 = vcombine.high %v26, %v26
    %vm33 = vcmask 1043456
    %v34 = vsel %vm33, %v25, 0.0
    %v35 = vrot.slane %v34, 4
    %v36 = vadd.f32 %v34, %v35
    %v37 = vrot.slane %v36, 2
    %v38 = vadd.f32 %v36, %v37
    %v39 = vrot.slane %v38, 1
    %v40 = vadd.f32 %v38, %v39
    %v41 = vsel %vm33, %v29, 0.0
    %v42 = vrot.slane %v41, 4
    %v43 = vadd.f32 %v41, %v42
    %v44 = vrot.slane %v43, 2
    %v45 = vadd.f32 %v43, %v44
    %v46 = vrot.slane %v45, 1
    %v47 = vadd.f32 %v45, %v46
    %v48 = vsel %vm33, %v26, 0.0
    %v49 = vrot.slane %v48, 4
    %v50 = vadd.f32 %v48, %v49
    %v51 = vrot.slane %v50, 2
    %v52 = vadd.f32 %v50, %v51
    %v53 = vrot.slane %v52, 1
    %v54 = vadd.f32 %v52, %v53
    %v55 = vsel %vm33, %v30, 0.0
    %v56 = vrot.slane %v55, 4
    %v57 = vadd.f32 %v55, %v56
    %v58 = vrot.slane %v57, 2
    %v59 = vadd.f32 %v57, %v58
    %v60 = vrot.slane %v59, 1
    %v61 = vadd.f32 %v59, %v60
    %v62 = vmax.f32 %v40, 1e-16
    %v63 = vmax.f32 %v47, 1e-16
    %v64 = vmax.f32 %v54, 1e-16
    %v65 = vmax.f32 %v61, 1e-16
    %v66 = vrsqrt.pop %v62
    %v67 = vrsqrt.pop %v63
    %v68 = vrsqrt.pop %v64
    %v69 = vrsqrt.pop %v65
    %v74 = vcombine.low %v66, %v67
    %v75 = vcombine.low %v68, %v69
    %v78 = vmul.f32 %v23, %v74
    %v79 = vmul.f32 %v24, %v75
    %80 = vst [vmem:[#allocation5] sm:$0xff] %v78
    %81 = vst [vmem:[#allocation5 + $0x8] sm:$0xff] %v79
    // Predicated region
    $region10: #{tpu_custom_call.1} parent=1 // pred_check
      _
    $region11: #{tpu_custom_call.1} parent=1 // pred_check_branch
      %83 = sbr.rel (0) target = $region13
    $region12: #{tpu_custom_call.1} parent=1 // pred_region
      %s85 = ssub.s32 256, 256
      %86 = vsyncadd [#allocation4], %s85
      %s87 = sshll.u32 [#allocation5], 4
      %s88 = int_to_ptr.vmem [resolvable:$true] %s87
      %93 = dma.vmem_to_hbm [thread:$0]  %s88, 256, %s1, [#allocation4], 128, 128, 8
    $region13: #{tpu_custom_call.1} parent=1 // pred_fallthru
      _
    // Predicated region
    $region14: #{tpu_custom_call.1} parent=1 // pred_check
      _
    $region15: #{tpu_custom_call.1} parent=1 // pred_check_branch
      %95 = sbr.rel (0) target = $region17
    $region16: #{tpu_custom_call.1} parent=1 // pred_region
      %96 = dma.done [#allocation4], 256
    $region17: #{tpu_custom_call.1} parent=1 // pred_fallthru
      _
    %97 = vsyncpa [#allocation3], 1
    %98 = vsyncpa [#allocation4], 1

</llo_original>
